<compile_context>
chip_gen: v7x
topology: tpu7x:2x2x1
jax: 0.10.0
libtpu: 0.0.40
codegen_flags: <defaults>
</compile_context>

<pallas_src>
import functools

import jax
import jax.numpy as jnp
from jax import lax
from jax.experimental import pallas as pl
from jax.experimental.pallas import tpu as pltpu


# ---------------------------------------------------------------------------
# VMEM sizing: generation-aware budget (for tile selection) and scoped limit.
# ---------------------------------------------------------------------------
def _vmem_budget_and_limit():
    cap = None
    try:
        info = pltpu.get_tpu_info()
        cap = getattr(info, "vmem_capacity_bytes", None)
    except Exception:
        cap = None
    if not cap:
        cap = 64 * 1024 * 1024          # v7x-safe fallback (64 MiB physical VMEM)
    return int(cap * 0.70), int(cap * 0.85)


# ---------------------------------------------------------------------------
# Kernel: one (batch-block, q-tile, k-tile) step with an online-softmax update.
# ---------------------------------------------------------------------------
def _sdpa_kernel(*refs, inv_temperature, has_mask, emit_attn, use_bf16):
    idx = 0
    q_ref = refs[idx]; idx += 1
    k_ref = refs[idx]; idx += 1
    v_ref = refs[idx]; idx += 1
    mask_ref = None
    if has_mask:
        mask_ref = refs[idx]; idx += 1
    out_ref = refs[idx]; idx += 1
    attn_ref = None
    if emit_attn:
        attn_ref = refs[idx]; idx += 1
    m_sc, l_sc, acc_sc = refs[idx:idx + 3]

    kk = pl.program_id(2)

    @pl.when(kk == 0)
    def _():
        m_sc[...] = jnp.full_like(m_sc, -jnp.inf)
        l_sc[...] = jnp.zeros_like(l_sc)
        acc_sc[...] = jnp.zeros_like(acc_sc)

    # Fold 1/temperature into q: (bb, tq, D) VPU multiplies instead of (bb, tq, tk).
    q = q_ref[...]
    q = q * jnp.asarray(inv_temperature, dtype=q.dtype)
    k = k_ref[...]
    v = v_ref[...]
    if use_bf16:
        # bf16 MXU path, f32 accumulation — MXU peak on v5e/v6e/v7x.
        q = q.astype(jnp.bfloat16)
        k = k.astype(jnp.bfloat16)
        v = v.astype(jnp.bfloat16)

    # scores = q @ k^T, batched over bb, contracting the feature dim of both operands
    # directly (no explicit transpose of k).
    s = lax.dot_general(
        q, k,
        dimension_numbers=(((2,), (2,)), ((0,), (0,))),
        preferred_element_type=jnp.float32)                      # (bb, tq, tk) f32

    if has_mask:
        # Large finite negative instead of -inf: a fully-masked row yields a uniform
        # distribution instead of NaN (documented divergence from masked_fill(-inf)).
        s = jnp.where(mask_ref[...] != 0, jnp.float32(-1e30), s)

    # Online (flash-style) softmax update; exact single-pass softmax when the
    # Lk grid has one step (always the case when emit_attn=True).
    m_prev = m_sc[...]
    m_new = jnp.maximum(m_prev, jnp.max(s, axis=-1, keepdims=True))
    alpha = jnp.exp(m_prev - m_new)
    e = jnp.exp(s - m_new)
    l_new = alpha * l_sc[...] + jnp.sum(e, axis=-1, keepdims=True)

    p = e.astype(v.dtype)                                        # unnormalized weights
    pv = lax.dot_general(
        p, v,
        dimension_numbers=(((2,), (1,)), ((0,), (0,))),
        preferred_element_type=jnp.float32)                      # (bb, tq, Dv) f32
    acc_sc[...] = alpha * acc_sc[...] + pv
    l_sc[...] = l_new
    m_sc[...] = m_new

    if emit_attn:
        # Valid because return_attn=True forces a single Lk step -> l_new is the
        # full-row denominator.
        attn_ref[...] = (e * pl.reciprocal(l_new, approx=True)).astype(attn_ref.dtype)

    @pl.when(kk == pl.num_programs(2) - 1)
    def _():
        # Normalize once on (bb, tq, Dv) instead of (bb, tq, Lk).
        out_ref[...] = (acc_sc[...] *
                        pl.reciprocal(l_sc[...], approx=True)).astype(out_ref.dtype)


# ---------------------------------------------------------------------------
# Tile selection.
# ---------------------------------------------------------------------------
def _divisor_tile(total, cap, granules=(32, 16, 8)):
    """Largest divisor of `total` that is <= cap and a multiple of one of `granules`
    (tried in order). Returns None if no such divisor exists; `total` itself (full
    dim) is always a legal block size and handled by the caller."""
    if total <= cap:
        return total
    for g in granules:
        t = (min(cap, total) // g) * g
        while t >= g:
            if total % t == 0:
                return t
            t -= g
    return None


def _bytes_per_step(bb, tq, tk, d, dv, *, in_bytes, out_bytes, attn_bytes,
                    has_mask, mask_rows, emit_attn):
    # BlockSpec-pipelined tiles (double-buffered).
    pipelined = bb * (tq * d + tk * d + tk * dv) * in_bytes            # q, k, v
    if has_mask:
        pipelined += bb * (tq if mask_rows > 1 else 1) * tk            # int8 mask
    pipelined += bb * tq * dv * out_bytes                              # out
    if emit_attn:
        pipelined += bb * tq * tk * attn_bytes                         # attn
    total = 2 * pipelined
    # Scratch accumulators (single copy, f32): m, l, acc.
    total += bb * tq * (2 + dv) * 4
    # In-kernel intermediates: ~2 live f32 (bb, tq, tk) arrays + bf16 staging copies.
    total += 2 * bb * tq * tk * 4
    total += bb * (tq * d + tk * (d + dv) + tq * tk) * 2
    return total


def _choose_tiles(b, lq, lk, d, dv, budget, **kw):
    emit_attn = kw["emit_attn"]

    def fits(bb, tq, tk):
        return _bytes_per_step(bb, tq, tk, d, dv, **kw) <= budget

    tq = _divisor_tile(lq, 512) or lq
    tk = lk
    bb = 1
    while True:
        found = False
        for cand in (8, 4, 2, 1):
            if b % cand == 0 and fits(cand, tq, tk):
                bb, found = cand, True
                break
        if found:
            break
        nt = _divisor_tile(lq, tq // 2)
        if nt is not None and nt < tq:
            tq = nt
            continue
        if not emit_attn:
            nk = _divisor_tile(lk, tk // 2, granules=(128, 8))
            if nk is not None and nk < tk:
                tk = nk
                continue
        bb = 1          # smallest feasible config; best effort for pathological shapes
        break

    # v7x has 2 TensorCores: guarantee >=2 steps on a "parallel" axis when possible
    # (near-free on single-TC v5e/v6e).
    if (b // bb) * (lq // tq) < 2:
        if bb > 1:
            for cand in range(bb // 2, 0, -1):
                if b % cand == 0:
                    bb = cand
                    break
        else:
            nt = _divisor_tile(lq, tq // 2)
            if nt is not None:
                tq = nt
    return bb, tq, tk


# ---------------------------------------------------------------------------
# Public wrapper.
# ---------------------------------------------------------------------------
def scaled_dot_product_attention(q, k, v, temperature, mask=None, *,
                                 return_attn=True, attn_dtype=None,
                                 use_bf16_mxu=True):
    """Pallas TPU implementation of ScaledDotProductAttention.forward (eval mode).

    Args:
      q: (B, Lq, D)   k: (B, Lk, D)   v: (B, Lk, Dv)
      temperature: python float scalar
      mask: optional mask; True/nonzero => masked out. Shapes (B, Lq, Lk),
            (B, 1, Lk) or (B, Lk) (key-padding) are accepted.
      return_attn: when False, skips the (B, Lq, Lk) attention writeback and uses an
                   Lk-tiled flash-style path whose VMEM is independent of Lk.
      attn_dtype: dtype of the returned attention matrix (default: q.dtype;
                  jnp.bfloat16 halves the dominant writeback stream).
      use_bf16_mxu: run both matmuls in bf16 with f32 accumulation (MXU peak).

    Returns:
      (output, attn) or just output when return_attn=False.
    """
    B, Lq, D = q.shape
    Bk, Lk, Dk = k.shape
    Bv, Lkv, Dv = v.shape
    assert Bk == B and Bv == B and Dk == D and Lkv == Lk

    out_dtype = q.dtype
    attn_dtype = out_dtype if attn_dtype is None else attn_dtype

    has_mask = mask is not None
    mask_rows = 0
    if has_mask:
        if mask.ndim == 2:                           # (B, Lk) key-padding mask
            mask = mask[:, None, :]
        assert mask.shape in ((B, 1, Lk), (B, Lq, Lk))
        mask_rows = mask.shape[1]
        if mask.dtype != jnp.int8:
            mask = mask.astype(jnp.int8)             # 1 byte/elem HBM stream

    budget, vmem_limit = _vmem_budget_and_limit()
    bb, tq, tk = _choose_tiles(
        B, Lq, Lk, D, Dv, budget,
        in_bytes=q.dtype.itemsize,
        out_bytes=jnp.dtype(out_dtype).itemsize,
        attn_bytes=jnp.dtype(attn_dtype).itemsize,
        has_mask=has_mask, mask_rows=mask_rows, emit_attn=return_attn)

    grid = (B // bb, Lq // tq, Lk // tk)

    q_spec = pl.BlockSpec((bb, tq, D), lambda b, i, kk: (b, i, 0))
    k_spec = pl.BlockSpec((bb, tk, D), lambda b, i, kk: (b, kk, 0))
    v_spec = pl.BlockSpec((bb, tk, Dv), lambda b, i, kk: (b, kk, 0))
    in_specs = [q_spec, k_spec, v_spec]
    inputs = [q, k, v]
    if has_mask:
        if mask_rows == 1:
            in_specs.append(pl.BlockSpec((bb, 1, tk), lambda b, i, kk: (b, 0, kk)))
        else:
            in_specs.append(pl.BlockSpec((bb, tq, tk), lambda b, i, kk: (b, i, kk)))
        inputs.append(mask)

    out_spec = pl.BlockSpec((bb, tq, Dv), lambda b, i, kk: (b, i, 0))
    out_shape = jax.ShapeDtypeStruct((B, Lq, Dv), out_dtype)
    if return_attn:
        # return_attn=True keeps a single Lk step (tk == Lk), so attn is exact.
        out_specs = (out_spec, pl.BlockSpec((bb, tq, Lk), lambda b, i, kk: (b, i, 0)))
        out_shapes = (out_shape, jax.ShapeDtypeStruct((B, Lq, Lk), attn_dtype))
    else:
        out_specs = out_spec
        out_shapes = out_shape

    kernel = functools.partial(
        _sdpa_kernel,
        inv_temperature=1.0 / float(temperature),
        has_mask=has_mask,
        emit_attn=return_attn,
        use_bf16=bool(use_bf16_mxu))

    scratch = [pltpu.VMEM((bb, tq, 1), jnp.float32),     # running max m
               pltpu.VMEM((bb, tq, 1), jnp.float32),     # running denom l
               pltpu.VMEM((bb, tq, Dv), jnp.float32)]    # running acc

    return pl.pallas_call(
        kernel,
        out_shape=out_shapes,
        grid_spec=pltpu.PrefetchScalarGridSpec(
            num_scalar_prefetch=0,
            grid=grid,
            in_specs=in_specs,
            out_specs=out_specs,
            scratch_shapes=scratch),
        compiler_params=pltpu.CompilerParams(
            dimension_semantics=("parallel", "parallel", "arbitrary"),
            vmem_limit_bytes=vmem_limit),
    )(*inputs)


if __name__ == "__main__":
    # Small shapes consistent with the module: batch=2, seq=8, hidden=32.
    B, Lq, Lk, D, Dv = 2, 8, 8, 32, 32
    temperature = float(D) ** 0.5

    key = jax.random.PRNGKey(0)
    kq, kk_, kv = jax.random.split(key, 3)
    q = jax.random.normal(kq, (B, Lq, D), dtype=jnp.float32)
    k = jax.random.normal(kk_, (B, Lk, D), dtype=jnp.float32)
    v = jax.random.normal(kv, (B, Lk, Dv), dtype=jnp.float32)

    # Pure-JAX reference (eval-mode dropout == identity).
    s_ref = jnp.einsum("bqd,bkd->bqk", q, k) / temperature
    attn_ref = jax.nn.softmax(s_ref, axis=2)
    out_ref = jnp.einsum("bqk,bkd->bqd", attn_ref, v)

    TOL = dict(atol=2e-2, rtol=2e-2)   # bf16-MXU path tolerance

    # Unmasked path.
    out, attn = scaled_dot_product_attention(q, k, v, temperature)
    jax.block_until_ready((out, attn))
    assert jnp.allclose(attn, attn_ref, **TOL)
    assert jnp.allclose(out, out_ref, **TOL)

    # Key-padding mask of shape (B, Lk): batch 1 ignores its last 3 keys.
    pad_mask = jnp.zeros((B, Lk), dtype=jnp.bool_).at[1, Lk - 3:].set(True)
    out_m, attn_m = scaled_dot_product_attention(q, k, v, temperature, mask=pad_mask)
    jax.block_until_ready((out_m, attn_m))
    s_m = jnp.where(pad_mask[:, None, :], -jnp.inf, s_ref)
    attn_m_ref = jax.nn.softmax(s_m, axis=2)
    out_m_ref = jnp.einsum("bqk,bkd->bqd", attn_m_ref, v)
    assert jnp.allclose(attn_m, attn_m_ref, **TOL)
    assert jnp.allclose(out_m, out_m_ref, **TOL)

    # Full (B, Lq, Lk) mask with the same content — exercises the per-query mask path.
    full_mask = jnp.broadcast_to(pad_mask[:, None, :], (B, Lq, Lk))
    out_f, attn_f = scaled_dot_product_attention(q, k, v, temperature, mask=full_mask)
    jax.block_until_ready((out_f, attn_f))
    assert jnp.allclose(attn_f, attn_m_ref, **TOL)
    assert jnp.allclose(out_f, out_m_ref, **TOL)

    # Output-only variant (skips the (B, Lq, Lk) attn HBM writeback, flash-style path).
    out_only = scaled_dot_product_attention(q, k, v, temperature, return_attn=False)
    jax.block_until_ready(out_only)
    assert jnp.allclose(out_only, out_ref, **TOL)

    print("KERNEL_OK")
</pallas_src>

<mosaic_0001>
module attributes {stable_mosaic.version = 11 : i64} {
  func.func @_sdpa_kernel(%arg0: i32, %arg1: i32, %arg2: i32, %arg3: memref<1x8x32xf32, #tpu.memory_space<vmem>>, %arg4: memref<1x8x32xf32, #tpu.memory_space<vmem>>, %arg5: memref<1x8x32xf32, #tpu.memory_space<vmem>>, %arg6: memref<1x8x32xf32, #tpu.memory_space<vmem>>, %arg7: memref<1x8x8xf32, #tpu.memory_space<vmem>>, %arg8: memref<1x8x1xf32, #tpu.memory_space<vmem>>, %arg9: memref<1x8x1xf32, #tpu.memory_space<vmem>>, %arg10: memref<1x8x32xf32, #tpu.memory_space<vmem>>) attributes {dimension_semantics = [#tpu.dimension_semantics<parallel>, #tpu.dimension_semantics<parallel>, #tpu.dimension_semantics<arbitrary>], iteration_bounds = array<i64: 2, 1, 1>, scalar_prefetch = 0 : i64, scratch_operands = 3 : i64, tpu.core_type = #tpu.core_type<tc>, window_params = [{transform_indices = @transform_0, window_bounds = array<i64: 1, 8, 32>}, {transform_indices = @transform_1, window_bounds = array<i64: 1, 8, 32>}, {transform_indices = @transform_2, window_bounds = array<i64: 1, 8, 32>}, {transform_indices = @transform_3, window_bounds = array<i64: 1, 8, 32>}, {transform_indices = @transform_4, window_bounds = array<i64: 1, 8, 8>}]} {
    %c0_i32 = arith.constant 0 : i32
    %0 = arith.cmpi eq, %arg2, %c0_i32 : i32
    %1 = arith.extui %0 : i1 to i32
    %c0_i32_0 = arith.constant 0 : i32
    %2 = arith.cmpi ne, %1, %c0_i32_0 : i32
    scf.if %2 {
      %cst_36 = arith.constant 0xFF800000 : f32
      %42 = vector.broadcast %cst_36 : f32 to vector<1x8x1xf32>
      %c0_37 = arith.constant 0 : index
      %c0_38 = arith.constant 0 : index
      %c0_39 = arith.constant 0 : index
      %43 = vector.load %arg8[%c0_37, %c0_38, %c0_39] : memref<1x8x1xf32, #tpu.memory_space<vmem>>, vector<1x8x1xf32>
      tpu.vector_store %arg8[%c0_37, %c0_38, %c0_39], %42 {strides = array<i32>} : memref<1x8x1xf32, #tpu.memory_space<vmem>>, vector<1x8x1xf32>,
      %cst_40 = arith.constant 0.000000e+00 : f32
      %44 = vector.broadcast %cst_40 : f32 to vector<1x8x1xf32>
      %c0_41 = arith.constant 0 : index
      %c0_42 = arith.constant 0 : index
      %c0_43 = arith.constant 0 : index
      %45 = vector.load %arg9[%c0_41, %c0_42, %c0_43] : memref<1x8x1xf32, #tpu.memory_space<vmem>>, vector<1x8x1xf32>
      tpu.vector_store %arg9[%c0_41, %c0_42, %c0_43], %44 {strides = array<i32>} : memref<1x8x1xf32, #tpu.memory_space<vmem>>, vector<1x8x1xf32>,
      %cst_44 = arith.constant 0.000000e+00 : f32
      %46 = vector.broadcast %cst_44 : f32 to vector<1x8x32xf32>
      %c0_45 = arith.constant 0 : index
      %c0_46 = arith.constant 0 : index
      %c0_47 = arith.constant 0 : index
      %47 = vector.load %arg10[%c0_45, %c0_46, %c0_47] : memref<1x8x32xf32, #tpu.memory_space<vmem>>, vector<1x8x32xf32>
      tpu.vector_store %arg10[%c0_45, %c0_46, %c0_47], %46 {strides = array<i32>} : memref<1x8x32xf32, #tpu.memory_space<vmem>>, vector<1x8x32xf32>,
    } else {
    }
    %c0 = arith.constant 0 : index
    %c0_1 = arith.constant 0 : index
    %c0_2 = arith.constant 0 : index
    %3 = vector.load %arg3[%c0, %c0_1, %c0_2] : memref<1x8x32xf32, #tpu.memory_space<vmem>>, vector<1x8x32xf32>
    %cst = arith.constant 0.176776692 : f32
    %4 = vector.broadcast %cst : f32 to vector<1x8x32xf32>
    %5 = arith.mulf %3, %4 : vector<1x8x32xf32>
    %c0_3 = arith.constant 0 : index
    %c0_4 = arith.constant 0 : index
    %c0_5 = arith.constant 0 : index
    %6 = vector.load %arg4[%c0_3, %c0_4, %c0_5] : memref<1x8x32xf32, #tpu.memory_space<vmem>>, vector<1x8x32xf32>
    %c0_6 = arith.constant 0 : index
    %c0_7 = arith.constant 0 : index
    %c0_8 = arith.constant 0 : index
    %7 = vector.load %arg5[%c0_6, %c0_7, %c0_8] : memref<1x8x32xf32, #tpu.memory_space<vmem>>, vector<1x8x32xf32>
    %8 = arith.truncf %5 : vector<1x8x32xf32> to vector<1x8x32xbf16>
    %9 = arith.truncf %6 : vector<1x8x32xf32> to vector<1x8x32xbf16>
    %10 = arith.truncf %7 : vector<1x8x32xf32> to vector<1x8x32xbf16>
    %cst_9 = arith.constant dense<0.000000e+00> : vector<1x8x8xf32>
    %11 = tpu.matmul %8, %9, %cst_9 {dimension_numbers = #tpu.dot_dimension_numbers<[2], [2], [1], [1], [0, 0, 0, 1, 1, 1], [0], [0]>} : vector<1x8x32xbf16>, vector<1x8x32xbf16>, vector<1x8x8xf32> -> vector<1x8x8xf32>
    %c0_10 = arith.constant 0 : index
    %c0_11 = arith.constant 0 : index
    %c0_12 = arith.constant 0 : index
    %12 = vector.load %arg8[%c0_10, %c0_11, %c0_12] : memref<1x8x1xf32, #tpu.memory_space<vmem>>, vector<1x8x1xf32>
    %cst_13 = arith.constant dense<0xFF800000> : vector<1x8xf32>
    %13 = vector.multi_reduction <maximumf>, %11, %cst_13 [2] : vector<1x8x8xf32> to vector<1x8xf32>
    %14 = vector.shape_cast %13 : vector<1x8xf32> to vector<1x8x1xf32>
    %15 = arith.maximumf %12, %14 : vector<1x8x1xf32>
    %16 = arith.subf %12, %15 : vector<1x8x1xf32>
    %17 = math.exp %16 : vector<1x8x1xf32>
    %18 = vector.broadcast %15 : vector<1x8x1xf32> to vector<1x8x8xf32>
    %19 = arith.subf %11, %18 : vector<1x8x8xf32>
    %20 = math.exp %19 : vector<1x8x8xf32>
    %c0_14 = arith.constant 0 : index
    %c0_15 = arith.constant 0 : index
    %c0_16 = arith.constant 0 : index
    %21 = vector.load %arg9[%c0_14, %c0_15, %c0_16] : memref<1x8x1xf32, #tpu.memory_space<vmem>>, vector<1x8x1xf32>
    %22 = arith.mulf %17, %21 : vector<1x8x1xf32>
    %cst_17 = arith.constant dense<0.000000e+00> : vector<1x8xf32>
    %23 = vector.multi_reduction <add>, %20, %cst_17 [2] : vector<1x8x8xf32> to vector<1x8xf32>
    %24 = vector.shape_cast %23 : vector<1x8xf32> to vector<1x8x1xf32>
    %25 = arith.addf %22, %24 : vector<1x8x1xf32>
    %26 = arith.truncf %20 : vector<1x8x8xf32> to vector<1x8x8xbf16>
    %cst_18 = arith.constant dense<0.000000e+00> : vector<1x8x32xf32>
    %27 = tpu.matmul %26, %10, %cst_18 {dimension_numbers = #tpu.dot_dimension_numbers<[2], [1], [1], [2], [0, 0, 0, 1, 1, 2], [0], [0]>} : vector<1x8x8xbf16>, vector<1x8x32xbf16>, vector<1x8x32xf32> -> vector<1x8x32xf32>
    %c0_19 = arith.constant 0 : index
    %c0_20 = arith.constant 0 : index
    %c0_21 = arith.constant 0 : index
    %28 = vector.load %arg10[%c0_19, %c0_20, %c0_21] : memref<1x8x32xf32, #tpu.memory_space<vmem>>, vector<1x8x32xf32>
    %29 = vector.broadcast %17 : vector<1x8x1xf32> to vector<1x8x32xf32>
    %30 = arith.mulf %29, %28 : vector<1x8x32xf32>
    %31 = arith.addf %30, %27 : vector<1x8x32xf32>
    %c0_22 = arith.constant 0 : index
    %c0_23 = arith.constant 0 : index
    %c0_24 = arith.constant 0 : index
    %32 = vector.load %arg10[%c0_22, %c0_23, %c0_24] : memref<1x8x32xf32, #tpu.memory_space<vmem>>, vector<1x8x32xf32>
    tpu.vector_store %arg10[%c0_22, %c0_23, %c0_24], %31 {strides = array<i32>} : memref<1x8x32xf32, #tpu.memory_space<vmem>>, vector<1x8x32xf32>,
    %c0_25 = arith.constant 0 : index
    %c0_26 = arith.constant 0 : index
    %c0_27 = arith.constant 0 : index
    %33 = vector.load %arg9[%c0_25, %c0_26, %c0_27] : memref<1x8x1xf32, #tpu.memory_space<vmem>>, vector<1x8x1xf32>
    tpu.vector_store %arg9[%c0_25, %c0_26, %c0_27], %25 {strides = array<i32>} : memref<1x8x1xf32, #tpu.memory_space<vmem>>, vector<1x8x1xf32>,
    %c0_28 = arith.constant 0 : index
    %c0_29 = arith.constant 0 : index
    %c0_30 = arith.constant 0 : index
    %34 = vector.load %arg8[%c0_28, %c0_29, %c0_30] : memref<1x8x1xf32, #tpu.memory_space<vmem>>, vector<1x8x1xf32>
    tpu.vector_store %arg8[%c0_28, %c0_29, %c0_30], %15 {strides = array<i32>} : memref<1x8x1xf32, #tpu.memory_space<vmem>>, vector<1x8x1xf32>,
    %35 = tpu.reciprocal %25 {approx = true} : vector<1x8x1xf32> -> vector<1x8x1xf32>
    %36 = vector.broadcast %35 : vector<1x8x1xf32> to vector<1x8x8xf32>
    %37 = arith.mulf %20, %36 : vector<1x8x8xf32>
    %c0_31 = arith.constant 0 : index
    %c0_32 = arith.constant 0 : index
    %c0_33 = arith.constant 0 : index
    %38 = vector.load %arg7[%c0_31, %c0_32, %c0_33] : memref<1x8x8xf32, #tpu.memory_space<vmem>>, vector<1x8x8xf32>
    tpu.vector_store %arg7[%c0_31, %c0_32, %c0_33], %37 {strides = array<i32>} : memref<1x8x8xf32, #tpu.memory_space<vmem>>, vector<1x8x8xf32>,
    %c0_i32_34 = arith.constant 0 : i32
    %39 = arith.cmpi eq, %arg2, %c0_i32_34 : i32
    %40 = arith.extui %39 : i1 to i32
    %c0_i32_35 = arith.constant 0 : i32
    %41 = arith.cmpi ne, %40, %c0_i32_35 : i32
    scf.if %41 {
      %c0_36 = arith.constant 0 : index
      %c0_37 = arith.constant 0 : index
      %c0_38 = arith.constant 0 : index
      %42 = vector.load %arg10[%c0_36, %c0_37, %c0_38] : memref<1x8x32xf32, #tpu.memory_space<vmem>>, vector<1x8x32xf32>
      %c0_39 = arith.constant 0 : index
      %c0_40 = arith.constant 0 : index
      %c0_41 = arith.constant 0 : index
      %43 = vector.load %arg9[%c0_39, %c0_40, %c0_41] : memref<1x8x1xf32, #tpu.memory_space<vmem>>, vector<1x8x1xf32>
      %44 = tpu.reciprocal %43 {approx = true} : vector<1x8x1xf32> -> vector<1x8x1xf32>
      %45 = vector.broadcast %44 : vector<1x8x1xf32> to vector<1x8x32xf32>
      %46 = arith.mulf %42, %45 : vector<1x8x32xf32>
      %c0_42 = arith.constant 0 : index
      %c0_43 = arith.constant 0 : index
      %c0_44 = arith.constant 0 : index
      %47 = vector.load %arg6[%c0_42, %c0_43, %c0_44] : memref<1x8x32xf32, #tpu.memory_space<vmem>>, vector<1x8x32xf32>
      tpu.vector_store %arg6[%c0_42, %c0_43, %c0_44], %46 {strides = array<i32>} : memref<1x8x32xf32, #tpu.memory_space<vmem>>, vector<1x8x32xf32>,
    } else {
    }
    return
  }
  func.func @transform_0(%arg0: i32, %arg1: i32, %arg2: i32) -> (i32, i32, i32) {
    %c0_i32 = arith.constant 0 : i32
    %c0_i32_0 = arith.constant 0 : i32
    return %arg0, %arg1, %c0_i32 : i32, i32, i32
  }
  func.func @transform_1(%arg0: i32, %arg1: i32, %arg2: i32) -> (i32, i32, i32) {
    %c0_i32 = arith.constant 0 : i32
    %c0_i32_0 = arith.constant 0 : i32
    return %arg0, %arg2, %c0_i32 : i32, i32, i32
  }
  func.func @transform_2(%arg0: i32, %arg1: i32, %arg2: i32) -> (i32, i32, i32) {
    %c0_i32 = arith.constant 0 : i32
    %c0_i32_0 = arith.constant 0 : i32
    return %arg0, %arg2, %c0_i32 : i32, i32, i32
  }
  func.func @transform_3(%arg0: i32, %arg1: i32, %arg2: i32) -> (i32, i32, i32) {
    %c0_i32 = arith.constant 0 : i32
    %c0_i32_0 = arith.constant 0 : i32
    return %arg0, %arg1, %c0_i32 : i32, i32, i32
  }
  func.func @transform_4(%arg0: i32, %arg1: i32, %arg2: i32) -> (i32, i32, i32) {
    %c0_i32 = arith.constant 0 : i32
    %c0_i32_0 = arith.constant 0 : i32
    return %arg0, %arg1, %c0_i32 : i32, i32, i32
  }
}

</mosaic_0001>

<llo_original>
// kernel: tpu_custom_call.1
$region0: #{tpu_custom_call.1}
  #allocation0 [shape = 'u32[]', space=smem, size = 0x4, offset = 0x4, fixed_abs, tag = 'smem constant byte address 0x4 - core index']
  #allocation1 [shape = 'u32[144,128]{1,0:T(1,128)}', space=vmem, size = 0x12000, scoped, tag = 'internal scratch']
  #allocation2 [shape = 'f32[1,8,1]{2,1,0:T(8,128)}', space=vmem, size = 0x1000, scoped, tag = 'scratch operand']
  #allocation3 [shape = 'f32[1,8,1]{2,1,0:T(8,128)}', space=vmem, size = 0x1000, scoped, tag = 'scratch operand']
  #allocation4 [shape = 'f32[1,8,32]{2,1,0:T(8,128)}', space=vmem, size = 0x1000, scoped, tag = 'scratch operand']
  %s0 = inlined_call_operand.hbm [shape: f32[2,8,32], index: 0, kind: input, shape index: {}]
  %s1 = inlined_call_operand.hbm [shape: f32[2,8,32], index: 1, kind: input, shape index: {}]
  %s2 = inlined_call_operand.hbm [shape: f32[2,8,32], index: 2, kind: input, shape index: {}]
  %s3 = inlined_call_operand.hbm [shape: f32[2,8,32], index: 3, kind: output, shape index: {0}]
  %s4 = inlined_call_operand.hbm [shape: f32[2,8,8], index: 4, kind: output, shape index: {1}]
  %5 = xla_tuple %s3, %s4
  %s6 = sld [smem:[#allocation0]]
  $region73: #{tpu_custom_call.1} parent=0
    _
  %s8 = ssub.s32 1, %s6
  %s9 = scalar_select 0, %s8, %s6
  $region1: #{tpu_custom_call.1} parent=0
    #allocation5 [shape = 'u8[8192]{0}', space=vmem, size = 0x2000, scoped, tag = 'input window, operand 0']
    #allocation6 [shape = 's32[2]{0}', space=sflag, size = 0x8, scoped, tag = 'scoped memory for tpu_custom_call.1']
    #allocation7 [shape = 's32[2]{0}', space=sflag, size = 0x8, scoped, tag = 'scoped memory for tpu_custom_call.1']
    #allocation8 [shape = 'u8[8192]{0}', space=vmem, size = 0x2000, scoped, tag = 'input window, operand 1']
    #allocation9 [shape = 's32[2]{0}', space=sflag, size = 0x8, scoped, tag = 'scoped memory for tpu_custom_call.1']
    #allocation10 [shape = 'u8[8192]{0}', space=vmem, size = 0x2000, scoped, tag = 'input window, operand 2']
    #allocation11 [shape = 'u8[8192]{0}', space=vmem, size = 0x2000, scoped, tag = 'output window, operand 0']
    #allocation12 [shape = 'u8[8192]{0}', space=vmem, size = 0x2000, scoped, tag = 'output window, operand 1']
    #allocation13 [shape = 's32[2]{0}', space=sflag, size = 0x8, scoped, tag = 'scoped memory for tpu_custom_call.1']
    %10 = vsyncpa [#allocation6], 0
    %s11 = scalar_lea.sflag [#allocation6], 1
    %12 = vsyncpa %s11, 0
    %13 = vsyncpa [#allocation9], 0
    %s14 = scalar_lea.sflag [#allocation9], 1
    %15 = vsyncpa %s14, 0
    %16 = vsyncpa [#allocation7], 0
    %s17 = scalar_lea.sflag [#allocation7], 1
    %18 = vsyncpa %s17, 0
    %19 = vsyncpa [#allocation13], 0
    %s20 = scalar_lea.sflag [#allocation13], 1
    %21 = vsyncpa %s20, 0
    loop: start=0, step=1, limit=4
    $region2: #{tpu_custom_call.1} parent=1 // loop_pre_header
      _
    $region3: #{tpu_custom_call.1} parent=1 // loop_header
      %s23 = sphi 0, %s27
      %p24 = scmp.ge.s32.totalorder %s23, 4
      %s30 = sphi 0, %s49
      %s31 = sphi 0, %s45
      %s32 = sphi 0, %s41
      %s33 = sphi 0, %s30
      %s34 = sphi 0, %s31
      %s35 = sphi 0, %s32
      %s36 = sphi 0, %s33
      %s37 = sphi 0, %s34
      %s38 = sphi 0, %s35
      %s54 = sphi 0, %s56
      %s57 = sphi 0, %s54
      %s58 = sphi 0, %s57
      %s74 = sphi 0, %s58
      %s82 = sphi 0, %s84
      %s85 = sphi 0, %s82
      %s86 = sphi 0, %s85
      %s102 = sphi 0, %s86
      %s110 = sphi 0, %s112
      %s113 = sphi 0, %s110
      %s114 = sphi 0, %s113
      %s130 = sphi 0, %s114
      %s138 = sphi 0, %s140
      %s141 = sphi 0, %s138
      %s142 = sphi 0, %s141
      %s158 = sphi 0, %s142
      %s166 = sphi 0, %s168
      %s169 = sphi 0, %s166
      %s170 = sphi 0, %s169
      %s186 = sphi 0, %s170
    $region4: #{tpu_custom_call.1} parent=1 // loop_header_branch
      %26 = sbr.rel (%p24) target = $region8
    $region5: #{tpu_custom_call.1} parent=1 // loop_body
      %s28 = ssub.s32 %s23, 1
      %s29 = ssub.s32 %s23, 2
      %s39 = sadd.s32 1, %s32
      %p40 = scmp.ge.s32.totalorder %s39, 1
      %s41 = scalar_select %p40, 0, %s39
      %s42 = sadd.s32 1, %s31
      %s43 = scalar_select %p40, %s42, %s31
      %p44 = scmp.ge.s32.totalorder %s43, 1
      %s45 = scalar_select %p44, 0, %s43
      %s46 = sadd.s32 1, %s30
      %s47 = scalar_select %p44, %s46, %s30
      %p48 = scmp.ge.s32.totalorder %s47, 2
      %s49 = scalar_select %p48, 0, %s47
      %s50 = ssub.s32 %s30, %s49
      %s51 = ssub.s32 %s31, %s45
      %s52 = sor.u32 %s50, %s51
      %p53 = scmp.eq.s32.totalorder %s52, 0
      %s55 = sadd.s32 %s54, 1
      %s56 = scalar_select %p53, %s54, %s55
      %p59 = pneg %p53
      %p60 = scmp.eq.s32.totalorder %s23, 1
      %p61 = por %p59, %p60
      %p62 = scmp.ne.s32.totalorder %s54, %s57
      %p63 = scmp.eq.s32.totalorder %s23, 0
      %p64 = por %p62, %p63
      %p65 = scmp.ne.s32.totalorder %s54, %s57
      %p66 = scmp.eq.s32.totalorder %s28, 1
      %p67 = por %p65, %p66
      %p68 = scmp.ne.s32.totalorder %s57, %s58
      %p69 = scmp.eq.s32.totalorder %s28, 0
      %p70 = por %p68, %p69
      %p71 = scmp.ne.s32.totalorder %s57, %s58
      %p72 = scmp.eq.s32.totalorder %s29, 1
      %p73 = por %p71, %p72
      %p75 = scmp.ne.s32.totalorder %s58, %s74
      %p76 = scmp.eq.s32.totalorder %s29, 0
      %p77 = por %p75, %p76
      %s78 = ssub.s32 %s30, %s49
      %s79 = ssub.s32 %s32, %s41
      %s80 = sor.u32 %s78, %s79
      %p81 = scmp.eq.s32.totalorder %s80, 0
      %s83 = sadd.s32 %s82, 1
      %s84 = scalar_select %p81, %s82, %s83
      %p87 = pneg %p81
      %p88 = scmp.eq.s32.totalorder %s23, 1
      %p89 = por %p87, %p88
      %p90 = scmp.ne.s32.totalorder %s82, %s85
      %p91 = scmp.eq.s32.totalorder %s23, 0
      %p92 = por %p90, %p91
      %p93 = scmp.ne.s32.totalorder %s82, %s85
      %p94 = scmp.eq.s32.totalorder %s28, 1
      %p95 = por %p93, %p94
      %p96 = scmp.ne.s32.totalorder %s85, %s86
      %p97 = scmp.eq.s32.totalorder %s28, 0
      %p98 = por %p96, %p97
      %p99 = scmp.ne.s32.totalorder %s85, %s86
      %p100 = scmp.eq.s32.totalorder %s29, 1
      %p101 = por %p99, %p100
      %p103 = scmp.ne.s32.totalorder %s86, %s102
      %p104 = scmp.eq.s32.totalorder %s29, 0
      %p105 = por %p103, %p104
      %s106 = ssub.s32 %s30, %s49
      %s107 = ssub.s32 %s32, %s41
      %s108 = sor.u32 %s106, %s107
      %p109 = scmp.eq.s32.totalorder %s108, 0
      %s111 = sadd.s32 %s110, 1
      %s112 = scalar_select %p109, %s110, %s111
      %p115 = pneg %p109
      %p116 = scmp.eq.s32.totalorder %s23, 1
      %p117 = por %p115, %p116
      %p118 = scmp.ne.s32.totalorder %s110, %s113
      %p119 = scmp.eq.s32.totalorder %s23, 0
      %p120 = por %p118, %p119
      %p121 = scmp.ne.s32.totalorder %s110, %s113
      %p122 = scmp.eq.s32.totalorder %s28, 1
      %p123 = por %p121, %p122
      %p124 = scmp.ne.s32.totalorder %s113, %s114
      %p125 = scmp.eq.s32.totalorder %s28, 0
      %p126 = por %p124, %p125
      %p127 = scmp.ne.s32.totalorder %s113, %s114
      %p128 = scmp.eq.s32.totalorder %s29, 1
      %p129 = por %p127, %p128
      %p131 = scmp.ne.s32.totalorder %s114, %s130
      %p132 = scmp.eq.s32.totalorder %s29, 0
      %p133 = por %p131, %p132
      %s134 = ssub.s32 %s30, %s49
      %s135 = ssub.s32 %s31, %s45
      %s136 = sor.u32 %s134, %s135
      %p137 = scmp.eq.s32.totalorder %s136, 0
      %s139 = sadd.s32 %s138, 1
      %s140 = scalar_select %p137, %s138, %s139
      %p143 = pneg %p137
      %p144 = scmp.eq.s32.totalorder %s23, 1
      %p145 = por %p143, %p144
      %p146 = scmp.ne.s32.totalorder %s138, %s141
      %p147 = scmp.eq.s32.totalorder %s23, 0
      %p148 = por %p146, %p147
      %p149 = scmp.ne.s32.totalorder %s138, %s141
      %p150 = scmp.eq.s32.totalorder %s28, 1
      %p151 = por %p149, %p150
      %p152 = scmp.ne.s32.totalorder %s141, %s142
      %p153 = scmp.eq.s32.totalorder %s28, 0
      %p154 = por %p152, %p153
      %p155 = scmp.ne.s32.totalorder %s141, %s142
      %p156 = scmp.eq.s32.totalorder %s29, 1
      %p157 = por %p155, %p156
      %p159 = scmp.ne.s32.totalorder %s142, %s158
      %p160 = scmp.eq.s32.totalorder %s29, 0
      %p161 = por %p159, %p160
      %s162 = ssub.s32 %s30, %s49
      %s163 = ssub.s32 %s31, %s45
      %s164 = sor.u32 %s162, %s163
      %p165 = scmp.eq.s32.totalorder %s164, 0
      %s167 = sadd.s32 %s166, 1
      %s168 = scalar_select %p165, %s166, %s167
      %p171 = pneg %p165
      %p172 = scmp.eq.s32.totalorder %s23, 1
      %p173 = por %p171, %p172
      %p174 = scmp.ne.s32.totalorder %s166, %s169
      %p175 = scmp.eq.s32.totalorder %s23, 0
      %p176 = por %p174, %p175
      %p177 = scmp.ne.s32.totalorder %s166, %s169
      %p178 = scmp.eq.s32.totalorder %s28, 1
      %p179 = por %p177, %p178
      %p180 = scmp.ne.s32.totalorder %s169, %s170
      %p181 = scmp.eq.s32.totalorder %s28, 0
      %p182 = por %p180, %p181
      %p183 = scmp.ne.s32.totalorder %s169, %s170
      %p184 = scmp.eq.s32.totalorder %s29, 1
      %p185 = por %p183, %p184
      %p187 = scmp.ne.s32.totalorder %s170, %s186
      %p188 = scmp.eq.s32.totalorder %s29, 0
      %p189 = por %p187, %p188
      %p190 = scmp.le.s32.totalorder 1, %s23
      %p191 = scmp.lt.s32.totalorder %s23, 3
      %p192 = pnand %p190, %p191
      %p193 = pneg %p192
      // Predicated region
      $region9: #{tpu_custom_call.1} parent=5 // pred_check
        _
      $region10: #{tpu_custom_call.1} parent=5 // pred_check_branch
        %195 = sbr.rel (%p192) target = $region12
      $region11: #{tpu_custom_call.1} parent=5 // pred_region
        %s196 = ssub.s32 %s23, 1
      $region12: #{tpu_custom_call.1} parent=5 // pred_fallthru
        _
      %p197 = scmp.lt.s32.totalorder %s23, 2
      // Predicated region
      $region13: #{tpu_custom_call.1} parent=5 // pred_check
        %p198 = pneg %p197
      $region14: #{tpu_custom_call.1} parent=5 // pred_check_branch
        %200 = sbr.rel (%p198) target = $region16
      $region15: #{tpu_custom_call.1} parent=5 // pred_region
        // Predicated region
        $region17: #{tpu_custom_call.1} parent=15 // pred_check
          %p201 = pneg %p64
        $region18: #{tpu_custom_call.1} parent=15 // pred_check_branch
          %203 = sbr.rel (%p201) target = $region20
        $region19: #{tpu_custom_call.1} parent=15 // pred_region
          %s204 = sand.u32 %s54, 1
          %s205 = scalar_lea.sflag [#allocation6], %s204
          %s206 = sand.u32 %s54, 1
          %s207 = smul.addr %s206, 8
          %s208 = scalar_lea.vmem [#allocation5], %s207
          %s210 = ssub.s32 128, 128
          %211 = vsyncadd %s205, %s210
          %s212 = sadd.s32 %s31, %s30
          %s213 = smul.addr %s212, 128
          %s214 = scalar_lea.hbm %s0, %s213
          %s216 = sshll.u32 %s208, 4
          %s217 = int_to_ptr.vmem [resolvable:$true] %s216
          %219 = dma.hbm_to_vmem [thread:$0]  %s214, 128, %s217, %s205
        $region20: #{tpu_custom_call.1} parent=15 // pred_fallthru
          _
        // Predicated region
        $region21: #{tpu_custom_call.1} parent=15 // pred_check
          %p220 = pneg %p92
        $region22: #{tpu_custom_call.1} parent=15 // pred_check_branch
          %222 = sbr.rel (%p220) target = $region24
        $region23: #{tpu_custom_call.1} parent=15 // pred_region
          %s223 = sand.u32 %s23, 1
          %s224 = scalar_lea.sflag [#allocation9], %s223
          %s225 = sand.u32 %s82, 1
          %s226 = smul.addr %s225, 8
          %s227 = scalar_lea.vmem [#allocation8], %s226
          %s229 = ssub.s32 128, 128
          %230 = vsyncadd %s224, %s229
          %s231 = sadd.s32 %s32, %s30
          %s232 = smul.addr %s231, 128
          %s233 = scalar_lea.hbm %s1, %s232
          %s235 = sshll.u32 %s227, 4
          %s236 = int_to_ptr.vmem [resolvable:$true] %s235
          %238 = dma.hbm_to_vmem [thread:$0]  %s233, 128, %s236, %s224
        $region24: #{tpu_custom_call.1} parent=15 // pred_fallthru
          _
        // Predicated region
        $region25: #{tpu_custom_call.1} parent=15 // pred_check
          %p239 = pneg %p120
        $region26: #{tpu_custom_call.1} parent=15 // pred_check_branch
          %241 = sbr.rel (%p239) target = $region28
        $region27: #{tpu_custom_call.1} parent=15 // pred_region
          %s242 = sand.u32 %s23, 1
          %s243 = scalar_lea.sflag [#allocation9], %s242
          %s244 = sand.u32 %s110, 1
          %s245 = smul.addr %s244, 8
          %s246 = scalar_lea.vmem [#allocation10], %s245
          %s248 = ssub.s32 128, 128
          %249 = vsyncadd %s243, %s248
          %s250 = sadd.s32 %s32, %s30
          %s251 = smul.addr %s250, 128
          %s252 = scalar_lea.hbm %s2, %s251
          %s254 = sshll.u32 %s246, 4
          %s255 = int_to_ptr.vmem [resolvable:$true] %s254
          %257 = dma.hbm_to_vmem [thread:$0]  %s252, 128, %s255, %s243
        $region28: #{tpu_custom_call.1} parent=15 // pred_fallthru
          _
      $region16: #{tpu_custom_call.1} parent=5 // pred_fallthru
        _
      %p258 = scmp.le.s32.totalorder 1, %s23
      %p259 = scmp.lt.s32.totalorder %s23, 3
      %p260 = pnand %p258, %p259
      %p261 = pneg %p260
      // Predicated region
      $region29: #{tpu_custom_call.1} parent=5 // pred_check
        _
      $region30: #{tpu_custom_call.1} parent=5 // pred_check_branch
        %263 = sbr.rel (%p260) target = $region32
      $region31: #{tpu_custom_call.1} parent=5 // pred_region
        %s264 = ssub.s32 %s23, 1
        %s265 = sand.u32 %s57, 1
        %s266 = scalar_lea.sflag [#allocation6], %s265
        %s267 = sand.u32 %s57, 1
        %s268 = smul.addr %s267, 8
        %s269 = scalar_lea.vmem [#allocation5], %s268
        // Predicated region
        $region33: #{tpu_custom_call.1} parent=31 // pred_check
          %p270 = pneg %p70
        $region34: #{tpu_custom_call.1} parent=31 // pred_check_branch
          %272 = sbr.rel (%p270) target = $region36
        $region35: #{tpu_custom_call.1} parent=31 // pred_region
          %273 = dma.done %s266, 128
        $region36: #{tpu_custom_call.1} parent=31 // pred_fallthru
          _
        %s274 = sand.u32 %s28, 1
        %s275 = scalar_lea.sflag [#allocation9], %s274
        %s276 = sand.u32 %s85, 1
        %s277 = smul.addr %s276, 8
        %s278 = scalar_lea.vmem [#allocation8], %s277
        // Predicated region
        $region37: #{tpu_custom_call.1} parent=31 // pred_check
          %p279 = pneg %p98
        $region38: #{tpu_custom_call.1} parent=31 // pred_check_branch
          %281 = sbr.rel (%p279) target = $region40
        $region39: #{tpu_custom_call.1} parent=31 // pred_region
          %282 = dma.done %s275, 128
        $region40: #{tpu_custom_call.1} parent=31 // pred_fallthru
          _
        %s283 = sand.u32 %s28, 1
        %s284 = scalar_lea.sflag [#allocation9], %s283
        %s285 = sand.u32 %s113, 1
        %s286 = smul.addr %s285, 8
        %s287 = scalar_lea.vmem [#allocation10], %s286
        // Predicated region
        $region41: #{tpu_custom_call.1} parent=31 // pred_check
          %p288 = pneg %p126
        $region42: #{tpu_custom_call.1} parent=31 // pred_check_branch
          %290 = sbr.rel (%p288) target = $region44
        $region43: #{tpu_custom_call.1} parent=31 // pred_region
          %291 = dma.done %s284, 128
        $region44: #{tpu_custom_call.1} parent=31 // pred_fallthru
          _
        %s292 = sand.u32 %s57, 1
        %s293 = scalar_lea.sflag [#allocation6], %s292
        %s294 = sand.u32 %s57, 1
        %s295 = smul.addr %s294, 8
        %s296 = scalar_lea.vmem [#allocation5], %s295
        %p297 = pneg %p70
        %p298 = pneg %p67
        %s299 = sand.u32 %s28, 1
        %s300 = scalar_lea.sflag [#allocation9], %s299
        %s301 = sand.u32 %s85, 1
        %s302 = smul.addr %s301, 8
        %s303 = scalar_lea.vmem [#allocation8], %s302
        %p304 = pneg %p98
        %p305 = pneg %p95
        %s306 = sand.u32 %s28, 1
        %s307 = scalar_lea.sflag [#allocation9], %s306
        %s308 = sand.u32 %s113, 1
        %s309 = smul.addr %s308, 8
        %s310 = scalar_lea.vmem [#allocation10], %s309
        %p311 = pneg %p126
        %p312 = pneg %p123
        %p313 = pneg %p154
        %p314 = pneg %p151
        %s315 = sand.u32 %s141, 1
        %s316 = scalar_lea.sflag [#allocation7], %s315
        %s317 = sand.u32 %s141, 1
        %s318 = smul.addr %s317, 8
        %s319 = scalar_lea.vmem [#allocation11], %s318
        %p320 = pneg %p182
        %p321 = pneg %p179
        %s322 = sand.u32 %s169, 1
        %s323 = scalar_lea.sflag [#allocation13], %s322
        %s324 = sand.u32 %s169, 1
        %s325 = smul.addr %s324, 8
        %s326 = scalar_lea.vmem [#allocation12], %s325
        %p328 = scmp.eq.s32.totalorder %s35, 0
        // Predicated region
        $region45: #{tpu_custom_call.1} parent=31 // pred_check
          %p329 = pneg %p328
        $region46: #{tpu_custom_call.1} parent=31 // pred_check_branch
          %331 = sbr.rel (%p329) target = $region48
        $region47: #{tpu_custom_call.1} parent=31 // pred_region
          %vm332 = vcmask 7168
          %333 = vst.msk [vmem:[#allocation2] sm:$0xff] %vm332, -inf
          %334 = vst.msk [vmem:[#allocation3] sm:$0xff] %vm332, 0.0
          %vm335 = vcmask 261120
          %336 = vst.msk [vmem:[#allocation4] sm:$0xff] %vm335, 0.0
        $region48: #{tpu_custom_call.1} parent=31 // pred_fallthru
          _
        %v337 = vld [vmem:[%s269] sm:$0xff]
        %v338 = vmul.f32 %v337, 0.17677669
        %v339 = vld [vmem:[%s278] sm:$0xff]
        %v340 = vld [vmem:[%s287] sm:$0xff]
        %v341 = vpack.c.bf16 %v338, %v338
        %v342 = vpack.c.bf16 %v339, %v339
        %v343 = vpack.c.bf16 %v340, %v340
        %vm344 = vcmask 261120
        %v346 = vsel %vm344, %v341, 0
        %v349 = vsel %vm344, %v342, 0
        %351 = vmatprep.subr.bf16.mxu0 0
        %352 = vmatpush1.bf16.xpose.msra.mxu0 %v349
        %353 = vmatprep.subr.bf16.mxu0 0
        %354 = vmatpush1.bf16.xpose.msra.mxu0 0
        %355 = vmatprep.subr.bf16.mxu0 0
        %356 = vmatpush1.bf16.xpose.msra.mxu0 0
        %357 = vmatprep.subr.bf16.mxu0 0
        %358 = vmatpush1.bf16.xpose.msra.mxu0 0
        %359 = vmatprep.subr.bf16.mxu0 0
        %360 = vmatpush1.bf16.xpose.msra.mxu0 0
        %361 = vmatprep.subr.bf16.mxu0 0
        %362 = vmatpush1.bf16.xpose.msra.mxu0 0
        %363 = vmatprep.subr.bf16.mxu0 0
        %364 = vmatpush1.bf16.xpose.msra.mxu0 0
        %365 = vmatprep.subr.bf16.mxu0 0
        %366 = vmatpush1.bf16.xpose.msra.mxu0 0
        %367 = vmatprep.subr.bf16.mxu0 0
        %368 = vmatpush1.bf16.xpose.msra.mxu0 0
        %369 = vmatprep.subr.bf16.mxu0 0
        %370 = vmatpush1.bf16.xpose.msra.mxu0 0
        %371 = vmatprep.subr.bf16.mxu0 0
        %372 = vmatpush1.bf16.xpose.msra.mxu0 0
        %373 = vmatprep.subr.bf16.mxu0 0
        %374 = vmatpush1.bf16.xpose.msra.mxu0 0
        %375 = vmatprep.subr.bf16.mxu0 0
        %376 = vmatpush1.bf16.xpose.msra.mxu0 0
        %377 = vmatprep.subr.bf16.mxu0 0
        %378 = vmatpush1.bf16.xpose.msra.mxu0 0
        %379 = vmatprep.subr.bf16.mxu0 0
        %380 = vmatpush1.bf16.xpose.msra.mxu0 0
        %381 = vmatprep.subr.bf16.mxu0 0
        %382 = vmatpush1.bf16.xpose.msra.mxu0 0
        %383 = vmatprep.mubr.bf16.mxu0 0
        %384 = vmatmul.mubr.bf16.gmra.mrb[0].mxu0 %v346
        %v385 = vpop.f32.mrb[0].mxu0
        %v386 = vadd.f32 0.0, %v385
        %v387 = vpop.f32.mrb[0].mxu0
        %v388 = vpop.f32.mrb[0].mxu0
        %v389 = vpop.f32.mrb[0].mxu0
        %390 = vdwg.mxu0
        %v391 = vld [vmem:[#allocation2] sm:$0xff]
        %vm392 = vcmask 64512
        %v393 = vsel %vm392, %v386, -inf
        %394 = vmax.xlane.f32.xlu0 %v393
        %v395 = vpop.xlane.xlu0 %394
        %v396 = vmax.f32 %v391, %v395
        %v397 = vsub.f32 %v391, %v396
        %v398 = vmul.f32 %v397, 1.442695
        %v399 = vpow.pop %v398
        %401 = vset.pattern.permute.xlu0 0
        %402 = vperm.xlu0 %401, %v396
        %v403 = vpop.permute.xlu0 %402
        %v405 = vsub.f32 %v386, %v403
        %v406 = vmul.f32 %v405, 1.442695
        %v407 = vpow.pop %v406
        %v408 = vld [vmem:[#allocation3] sm:$0xff]
        %v409 = vmul.f32 %v399, %v408
        %v410 = vsel %vm392, %v407, 0.0
        %411 = vadd.xlane.f32.xlu0 %v410
        %v412 = vpop.xlane.xlu0 %411
        %v413 = vadd.f32 %v409, %v412
        %v414 = vpack.c.bf16 %v407, %v407
        %v416 = vsel %vm392, %v414, 0
        %vm418 = vcmask 1043456
        %v420 = vsel %vm418, %v343, 0
        %422 = vmatprep.subr.bf16.mxu0 0
        %423 = vmatpush1.bf16.msra.mxu0 %v420
        %424 = vmatprep.subr.bf16.mxu0 0
        %425 = vmatpush1.bf16.msra.mxu0 0
        %426 = vmatprep.subr.bf16.mxu0 0
        %427 = vmatpush1.bf16.msra.mxu0 0
        %428 = vmatprep.subr.bf16.mxu0 0
        %429 = vmatpush1.bf16.msra.mxu0 0
        %430 = vmatprep.subr.bf16.mxu0 0
        %431 = vmatpush1.bf16.msra.mxu0 0
        %432 = vmatprep.subr.bf16.mxu0 0
        %433 = vmatpush1.bf16.msra.mxu0 0
        %434 = vmatprep.subr.bf16.mxu0 0
        %435 = vmatpush1.bf16.msra.mxu0 0
        %436 = vmatprep.subr.bf16.mxu0 0
        %437 = vmatpush1.bf16.msra.mxu0 0
        %438 = vmatprep.subr.bf16.mxu0 0
        %439 = vmatpush1.bf16.msra.mxu0 0
        %440 = vmatprep.subr.bf16.mxu0 0
        %441 = vmatpush1.bf16.msra.mxu0 0
        %442 = vmatprep.subr.bf16.mxu0 0
        %443 = vmatpush1.bf16.msra.mxu0 0
        %444 = vmatprep.subr.bf16.mxu0 0
        %445 = vmatpush1.bf16.msra.mxu0 0
        %446 = vmatprep.subr.bf16.mxu0 0
        %447 = vmatpush1.bf16.msra.mxu0 0
        %448 = vmatprep.subr.bf16.mxu0 0
        %449 = vmatpush1.bf16.msra.mxu0 0
        %450 = vmatprep.subr.bf16.mxu0 0
        %451 = vmatpush1.bf16.msra.mxu0 0
        %452 = vmatprep.subr.bf16.mxu0 0
        %453 = vmatpush1.bf16.msra.mxu0 0
        %454 = vmatprep.mubr.bf16.mxu0 0
        %455 = vmatmul.mubr.bf16.gmra.mrb[0].mxu0 %v416
        %v456 = vpop.f32.mrb[0].mxu0
        %v457 = vadd.f32 0.0, %v456
        %v458 = vpop.f32.mrb[0].mxu0
        %v459 = vpop.f32.mrb[0].mxu0
        %v460 = vpop.f32.mrb[0].mxu0
        %461 = vdwg.mxu0
        %v462 = vld [vmem:[#allocation4] sm:$0xff]
        %464 = vset.pattern.permute.xlu0 0
        %465 = vperm.xlu0 %464, %v399
        %v466 = vpop.permute.xlu0 %465
        %v468 = vmul.f32 %v466, %v462
        %v469 = vadd.f32 %v468, %v457
        %470 = vst.msk [vmem:[#allocation4] sm:$0xff] %vm344, %v469
        %vm471 = vcmask 7168
        %472 = vst.msk [vmem:[#allocation3] sm:$0xff] %vm471, %v413
        %473 = vst.msk [vmem:[#allocation2] sm:$0xff] %vm471, %v396
        %v474 = vrcp.pop %v413
        %476 = vset.pattern.permute.xlu0 0
        %477 = vperm.xlu0 %476, %v474
        %v478 = vpop.permute.xlu0 %477
        %v480 = vmul.f32 %v407, %v478
        %481 = vst.msk [vmem:[%s326] sm:$0xff] %vm392, %v480
        // Predicated region
        $region49: #{tpu_custom_call.1} parent=31 // pred_check
          %p482 = pneg %p328
        $region50: #{tpu_custom_call.1} parent=31 // pred_check_branch
          %484 = sbr.rel (%p482) target = $region52
        $region51: #{tpu_custom_call.1} parent=31 // pred_region
          %v485 = vld [vmem:[#allocation4] sm:$0xff]
          %v486 = vld [vmem:[#allocation3] sm:$0xff]
          %v487 = vrcp.pop %v486
          %489 = vset.pattern.permute.xlu0 0
          %490 = vperm.xlu0 %489, %v487
          %v491 = vpop.permute.xlu0 %490
          %v493 = vmul.f32 %v485, %v491
          %494 = vst.msk [vmem:[%s319] sm:$0xff] %vm344, %v493
        $region52: #{tpu_custom_call.1} parent=31 // pred_fallthru
          _
        %s495 = sand.u32 %s141, 1
        %s496 = scalar_lea.sflag [#allocation7], %s495
        %s497 = sand.u32 %s141, 1
        %s498 = smul.addr %s497, 8
        %s499 = scalar_lea.vmem [#allocation11], %s498
        %s500 = sand.u32 %s169, 1
        %s501 = scalar_lea.sflag [#allocation13], %s500
        %s502 = sand.u32 %s169, 1
        %s503 = smul.addr %s502, 8
        %s504 = scalar_lea.vmem [#allocation12], %s503
        // Predicated region
        $region53: #{tpu_custom_call.1} parent=31 // pred_check
          %p505 = pneg %p151
        $region54: #{tpu_custom_call.1} parent=31 // pred_check_branch
          %507 = sbr.rel (%p505) target = $region56
        $region55: #{tpu_custom_call.1} parent=31 // pred_region
          %s509 = ssub.s32 128, 128
          %510 = vsyncadd %s496, %s509
          %s511 = sadd.s32 %s34, %s33
          %s512 = smul.addr %s511, 128
          %s513 = scalar_lea.hbm %s3, %s512
          %s515 = sshll.u32 %s499, 4
          %s516 = int_to_ptr.vmem [resolvable:$true] %s515
          %518 = dma.vmem_to_hbm [thread:$0]  %s516, 128, %s513, %s496
        $region56: #{tpu_custom_call.1} parent=31 // pred_fallthru
          _
        // Predicated region
        $region57: #{tpu_custom_call.1} parent=31 // pred_check
          %p519 = pneg %p179
        $region58: #{tpu_custom_call.1} parent=31 // pred_check_branch
          %521 = sbr.rel (%p519) target = $region60
        $region59: #{tpu_custom_call.1} parent=31 // pred_region
          %s523 = ssub.s32 128, 128
          %524 = vsyncadd %s501, %s523
          %s525 = sadd.s32 %s34, %s33
          %s526 = smul.addr %s525, 128
          %s527 = scalar_lea.hbm %s4, %s526
          %s529 = sshll.u32 %s504, 4
          %s530 = int_to_ptr.vmem [resolvable:$true] %s529
          %532 = dma.vmem_to_hbm [thread:$0]  %s530, 128, %s527, %s501
        $region60: #{tpu_custom_call.1} parent=31 // pred_fallthru
          _
      $region32: #{tpu_custom_call.1} parent=5 // pred_fallthru
        _
      %p533 = scmp.le.s32.totalorder 2, %s23
      // Predicated region
      $region61: #{tpu_custom_call.1} parent=5 // pred_check
        %p534 = pneg %p533
      $region62: #{tpu_custom_call.1} parent=5 // pred_check_branch
        %536 = sbr.rel (%p534) target = $region64
      $region63: #{tpu_custom_call.1} parent=5 // pred_region
        %s537 = ssub.s32 %s23, 2
        // Predicated region
        $region65: #{tpu_custom_call.1} parent=63 // pred_check
          %p538 = pneg %p157
        $region66: #{tpu_custom_call.1} parent=63 // pred_check_branch
          %540 = sbr.rel (%p538) target = $region68
        $region67: #{tpu_custom_call.1} parent=63 // pred_region
          %s541 = sand.u32 %s142, 1
          %s542 = scalar_lea.sflag [#allocation7], %s541
          %s543 = sand.u32 %s142, 1
          %s544 = smul.addr %s543, 8
          %s545 = scalar_lea.vmem [#allocation11], %s544
          %546 = dma.done %s542, 128
        $region68: #{tpu_custom_call.1} parent=63 // pred_fallthru
          _
        // Predicated region
        $region69: #{tpu_custom_call.1} parent=63 // pred_check
          %p547 = pneg %p185
        $region70: #{tpu_custom_call.1} parent=63 // pred_check_branch
          %549 = sbr.rel (%p547) target = $region72
        $region71: #{tpu_custom_call.1} parent=63 // pred_region
          %s550 = sand.u32 %s170, 1
          %s551 = scalar_lea.sflag [#allocation13], %s550
          %s552 = sand.u32 %s170, 1
          %s553 = smul.addr %s552, 8
          %s554 = scalar_lea.vmem [#allocation12], %s553
          %555 = dma.done %s551, 128
        $region72: #{tpu_custom_call.1} parent=63 // pred_fallthru
          _
      $region64: #{tpu_custom_call.1} parent=5 // pred_fallthru
        _
    $region6: #{tpu_custom_call.1} parent=1 // loop_footer
      %s27 = sadd.s32 1, %s23
    $region7: #{tpu_custom_call.1} parent=1 // loop_footer_branch
      %22 = sbr.rel target = $region3
    $region8: #{tpu_custom_call.1} parent=1 // loop_exit
      _
    %556 = vsyncpa [#allocation6], 1
    %s557 = scalar_lea.sflag [#allocation6], 1
    %558 = vsyncpa %s557, 1
    %559 = vsyncpa [#allocation9], 1
    %s560 = scalar_lea.sflag [#allocation9], 1
    %561 = vsyncpa %s560, 1
    %562 = vsyncpa [#allocation7], 1
    %s563 = scalar_lea.sflag [#allocation7], 1
    %564 = vsyncpa %s563, 1
    %565 = vsyncpa [#allocation13], 1
    %s566 = scalar_lea.sflag [#allocation13], 1
    %567 = vsyncpa %s566, 1

</llo_original>
